<compile_context>
chip_gen: v7x
topology: tpu7x:2x2x1
jax: 0.10.0
libtpu: 0.0.40
codegen_flags: <defaults>
</compile_context>

<pallas_src>
import jax
import jax.numpy as jnp
from jax.experimental import pallas as pl
from jax.experimental.pallas import tpu as pltpu


def _round_up(n, m):
    return ((n + m - 1) // m) * m


def _make_mlp_kernel(n_hidden):
    """Fused kernel: `n_hidden` Linear+ReLU layers, then Linear(->1)+Sigmoid."""

    def kernel(*refs):
        # refs = (x, w0, b0, ..., w_{n-1}, b_{n-1}, w_head, b_head, o)
        x_ref = refs[0]
        o_ref = refs[-1]
        params = refs[1:-1]
        w_head_ref = params[-2]   # f32 (1, hidden_pad[-1]) row vector
        b_head_ref = params[-1]   # f32 (1, 1)

        # x arrives as f32 straight from HBM; cast to bf16 in-kernel (VPU) so
        # the wrapper does not spend an extra HBM pass on a standalone astype.
        x_f32 = x_ref[...]                          # (TILE_B, F) f32
        h_bf16 = x_f32.astype(jnp.bfloat16)
        h_f32 = x_f32                               # only used if n_hidden == 0
        for i in range(n_hidden):
            w = params[2 * i][...]                  # bf16 (in_pad, out_pad), resident
            b = params[2 * i + 1][...]              # f32 (1, out_pad)
            h_f32 = jnp.dot(h_bf16, w, preferred_element_type=jnp.float32) + b
            h_f32 = jnp.maximum(h_f32, 0.0)         # activation() == ReLU, f32 VPU
            h_bf16 = h_f32.astype(jnp.bfloat16)     # feed the next MXU matmul

        # Head: Linear(hidden -> 1) + Sigmoid on VPU/XLU (no N=1 MXU matmul,
        # no lane-width-1 masked store). Result is lane-dense (1, TILE_B).
        w_head = w_head_ref[...]                    # (1, hidden_pad) f32
        logit = jnp.sum(h_f32 * w_head, axis=-1)    # (TILE_B,)
        logit = logit[None, :] + b_head_ref[...]    # (1, TILE_B)
        o_ref[...] = jax.nn.sigmoid(logit).astype(o_ref.dtype)

    return kernel


def classification_model_forward(x, weights, biases, *, tile_b=8192):
    """x: (batch, input_size) f32.
    weights: list of (in_i, out_i) f32 arrays (transposed vs. PyTorch (out, in)).
    biases:  list of (out_i,) or (1, out_i) f32 arrays.
    Returns (batch, 1) f32 sigmoid probabilities."""
    x = jnp.asarray(x, jnp.float32)
    batch, in_features = x.shape
    n_hidden = len(weights) - 1
    assert n_hidden >= 1, "expect at least one hidden Linear+activation layer"

    # ---- Zero-pad hidden widths up to multiples of 128 (semantics preserving).
    # Input width is NOT padded (would 4x x HBM traffic on a mem-bound kernel).
    hidden_widths = [weights[i].shape[1] for i in range(n_hidden)]
    hidden_pad = [_round_up(w, 128) for w in hidden_widths]
    in_dims = [in_features] + hidden_pad[:-1]

    padded_params = []
    for i in range(n_hidden):
        w = jnp.asarray(weights[i], jnp.float32)
        b = jnp.asarray(biases[i], jnp.float32).reshape(1, -1)
        in_i, out_i = w.shape
        wp = jnp.zeros((in_dims[i], hidden_pad[i]), jnp.float32)
        wp = wp.at[:in_i, :out_i].set(w)
        bp = jnp.zeros((1, hidden_pad[i]), jnp.float32).at[:, :out_i].set(b)
        padded_params.append(wp.astype(jnp.bfloat16))  # bf16 weight for MXU / DMA
        padded_params.append(bp)                       # f32 bias
    # Head weight as a padded f32 row vector; head bias as (1, 1) f32.
    w_head = jnp.asarray(weights[-1], jnp.float32).reshape(-1)
    wh = jnp.zeros((1, hidden_pad[-1]), jnp.float32)
    wh = wh.at[0, : w_head.shape[0]].set(w_head)
    bh = jnp.asarray(biases[-1], jnp.float32).reshape(1, 1)
    padded_params.append(wh)
    padded_params.append(bh)

    # ---- Batch tiling.
    # Big, 128-aligned tiles amortize per-step overhead; keep >= 4 grid steps
    # when the batch is large enough (pipelining + v7x 2-TC "parallel" split).
    # No wrapper jnp.pad: Pallas masks the ragged final block's output stores.
    tile_b = min(tile_b, _round_up(batch, 128))
    tile_b = max(128, _round_up(tile_b, 128))
    while tile_b >= 2048 and pl.cdiv(batch, tile_b) < 4:
        tile_b //= 2
    tile_b = _round_up(tile_b, 128)
    grid_steps = pl.cdiv(batch, tile_b)

    kernel = _make_mlp_kernel(n_hidden)

    # x / output tiled over batch; params resident (constant block index).
    # If xprof shows exposed x-DMA waits on v5e, add pipeline_mode=pl.Buffered(3)
    # to x_spec only.
    x_spec = pl.BlockSpec((tile_b, in_features), lambda i: (i, 0))
    param_specs = [pl.BlockSpec(p.shape, lambda i: (0, 0)) for p in padded_params]
    out_spec = pl.BlockSpec((1, tile_b), lambda i: (0, i))

    # Advisory cost estimate for XLA scheduling around the custom call.
    rows = grid_steps * tile_b
    flops = 0
    for i in range(n_hidden):
        flops += 2 * rows * in_dims[i] * hidden_pad[i]
    flops += 2 * rows * hidden_pad[-1]
    param_bytes = sum(int(p.size) * p.dtype.itemsize for p in padded_params)
    bytes_accessed = batch * in_features * 4 + param_bytes + batch * 4
    cost = pl.CostEstimate(
        flops=int(flops),
        transcendentals=int(rows),
        bytes_accessed=int(bytes_accessed),
    )

    out = pl.pallas_call(
        kernel,
        out_shape=jax.ShapeDtypeStruct((1, batch), jnp.float32),
        grid=(grid_steps,),
        in_specs=[x_spec] + param_specs,
        out_specs=out_spec,
        compiler_params=pltpu.CompilerParams(
            dimension_semantics=("parallel",),     # 2-TC sharding on v7x
            vmem_limit_bytes=48 * 1024 * 1024,     # above v5e 16 MiB default,
        ),                                         # below v7x 64 MiB physical
        cost_estimate=cost,
    )(x, *padded_params)

    return out.reshape(batch, 1)


def _reference_forward_bf16(x, weights, biases):
    """Pure-JAX reference mimicking the kernel numerics (bf16 matmul inputs,
    f32 accumulation / elementwise, f32 head)."""
    h = jnp.asarray(x, jnp.float32)
    hf = h
    for w, b in zip(weights[:-1], biases[:-1]):
        hf = jnp.dot(h.astype(jnp.bfloat16), jnp.asarray(w, jnp.bfloat16),
                     preferred_element_type=jnp.float32) + jnp.asarray(b).reshape(1, -1)
        hf = jnp.maximum(hf, 0.0)
        h = hf
    logit = hf @ jnp.asarray(weights[-1], jnp.float32) + jnp.asarray(biases[-1]).reshape(1, -1)
    return jax.nn.sigmoid(logit)


def _reference_forward_f32(x, weights, biases):
    h = jnp.asarray(x, jnp.float32)
    for w, b in zip(weights[:-1], biases[:-1]):
        h = jnp.maximum(h @ w + jnp.asarray(b).reshape(1, -1), 0.0)
    return jax.nn.sigmoid(h @ weights[-1] + jnp.asarray(biases[-1]).reshape(1, -1))


if __name__ == "__main__":
    # ClassificationModel(input_size=32, n_layers=2, n_units=[64, 32],
    #                     activation=nn.ReLU)
    input_size = 32
    n_units = [64, 32]
    batch = 8

    key = jax.random.PRNGKey(0)
    keys = jax.random.split(key, 2 * (len(n_units) + 1) + 2)

    dims = [input_size] + n_units + [1]
    weights, biases = [], []
    for i in range(len(dims) - 1):
        fan_in, fan_out = dims[i], dims[i + 1]
        w = jax.random.normal(keys[2 * i], (fan_in, fan_out), jnp.float32) * 0.1
        b = jax.random.normal(keys[2 * i + 1], (1, fan_out), jnp.float32) * 0.01
        weights.append(w)
        biases.append(b)

    # --- small single-tile case (matches the module's toy config); the lone
    # block is ragged (batch=8 < tile), exercising the output edge masking.
    x = jax.random.normal(keys[-2], (batch, input_size), jnp.float32)
    out = jax.block_until_ready(classification_model_forward(x, weights, biases))
    assert out.shape == (batch, 1)
    assert bool(jnp.isfinite(out).all())
    ref_bf16 = _reference_forward_bf16(x, weights, biases)
    ref_f32 = _reference_forward_f32(x, weights, biases)
    assert jnp.allclose(out, ref_bf16, atol=1e-4, rtol=1e-4)
    assert jnp.allclose(out, ref_f32, atol=2e-2, rtol=2e-2)

    # --- multi-tile case with a ragged final tile (300 % 128 != 0): exercises
    # the batch grid and the no-pad / masked-edge-store path.
    batch2 = 300
    x2 = jax.random.normal(keys[-1], (batch2, input_size), jnp.float32)
    out2 = jax.block_until_ready(
        classification_model_forward(x2, weights, biases, tile_b=128))
    assert out2.shape == (batch2, 1)
    assert bool(jnp.isfinite(out2).all())
    ref2 = _reference_forward_bf16(x2, weights, biases)
    assert jnp.allclose(out2, ref2, atol=1e-4, rtol=1e-4)

    print("KERNEL_OK")
</pallas_src>

<mosaic_0001>
module attributes {stable_mosaic.version = 11 : i64} {
  func.func @kernel(%arg0: i32, %arg1: memref<128x32xf32, #tpu.memory_space<vmem>>, %arg2: memref<32x128xbf16, #tpu.memory_space<vmem>>, %arg3: memref<1x128xf32, #tpu.memory_space<vmem>>, %arg4: memref<128x128xbf16, #tpu.memory_space<vmem>>, %arg5: memref<1x128xf32, #tpu.memory_space<vmem>>, %arg6: memref<1x128xf32, #tpu.memory_space<vmem>>, %arg7: memref<1x1xf32, #tpu.memory_space<vmem>>, %arg8: memref<1x128xf32, #tpu.memory_space<vmem>>) attributes {dimension_semantics = [#tpu.dimension_semantics<parallel>], iteration_bounds = array<i64: 1>, scalar_prefetch = 0 : i64, scratch_operands = 0 : i64, tpu.core_type = #tpu.core_type<tc>, window_params = [{transform_indices = @transform_0, window_bounds = array<i64: 128, 32>}, {pipeline_mode = #tpu.pipeline_mode<synchronous>, transform_indices = @transform_1, window_bounds = array<i64: 32, 128>}, {pipeline_mode = #tpu.pipeline_mode<synchronous>, transform_indices = @transform_2, window_bounds = array<i64: 1, 128>}, {pipeline_mode = #tpu.pipeline_mode<synchronous>, transform_indices = @transform_3, window_bounds = array<i64: 128, 128>}, {pipeline_mode = #tpu.pipeline_mode<synchronous>, transform_indices = @transform_4, window_bounds = array<i64: 1, 128>}, {pipeline_mode = #tpu.pipeline_mode<synchronous>, transform_indices = @transform_5, window_bounds = array<i64: 1, 128>}, {pipeline_mode = #tpu.pipeline_mode<synchronous>, transform_indices = @transform_6, window_bounds = array<i64: 1, 1>}, {transform_indices = @transform_7, window_bounds = array<i64: 1, 128>}]} {
    %c0 = arith.constant 0 : index
    %c0_0 = arith.constant 0 : index
    %0 = vector.load %arg1[%c0, %c0_0] : memref<128x32xf32, #tpu.memory_space<vmem>>, vector<128x32xf32>
    %1 = arith.truncf %0 : vector<128x32xf32> to vector<128x32xbf16>
    %c0_1 = arith.constant 0 : index
    %c0_2 = arith.constant 0 : index
    %2 = vector.load %arg2[%c0_1, %c0_2] : memref<32x128xbf16, #tpu.memory_space<vmem>>, vector<32x128xbf16>
    %c0_3 = arith.constant 0 : index
    %c0_4 = arith.constant 0 : index
    %3 = vector.load %arg3[%c0_3, %c0_4] : memref<1x128xf32, #tpu.memory_space<vmem>>, vector<1x128xf32>
    %cst = arith.constant dense<0.000000e+00> : vector<128x128xf32>
    %4 = tpu.matmul %1, %2, %cst {dimension_numbers = #tpu.dot_dimension_numbers<[1], [0], [0], [1], [0, 0, 1, 1], [], []>} : vector<128x32xbf16>, vector<32x128xbf16>, vector<128x128xf32> -> vector<128x128xf32>
    %5 = vector.broadcast %3 : vector<1x128xf32> to vector<128x128xf32>
    %6 = arith.addf %4, %5 : vector<128x128xf32>
    %cst_5 = arith.constant 0.000000e+00 : f32
    %7 = vector.broadcast %cst_5 : f32 to vector<128x128xf32>
    %8 = arith.maximumf %6, %7 : vector<128x128xf32>
    %9 = arith.truncf %8 : vector<128x128xf32> to vector<128x128xbf16>
    %c0_6 = arith.constant 0 : index
    %c0_7 = arith.constant 0 : index
    %10 = vector.load %arg4[%c0_6, %c0_7] : memref<128x128xbf16, #tpu.memory_space<vmem>>, vector<128x128xbf16>
    %c0_8 = arith.constant 0 : index
    %c0_9 = arith.constant 0 : index
    %11 = vector.load %arg5[%c0_8, %c0_9] : memref<1x128xf32, #tpu.memory_space<vmem>>, vector<1x128xf32>
    %cst_10 = arith.constant dense<0.000000e+00> : vector<128x128xf32>
    %12 = tpu.matmul %9, %10, %cst_10 {dimension_numbers = #tpu.dot_dimension_numbers<[1], [0], [0], [1], [0, 0, 1, 1], [], []>} : vector<128x128xbf16>, vector<128x128xbf16>, vector<128x128xf32> -> vector<128x128xf32>
    %13 = vector.broadcast %11 : vector<1x128xf32> to vector<128x128xf32>
    %14 = arith.addf %12, %13 : vector<128x128xf32>
    %cst_11 = arith.constant 0.000000e+00 : f32
    %15 = vector.broadcast %cst_11 : f32 to vector<128x128xf32>
    %16 = arith.maximumf %14, %15 : vector<128x128xf32>
    %c0_12 = arith.constant 0 : index
    %c0_13 = arith.constant 0 : index
    %17 = vector.load %arg6[%c0_12, %c0_13] : memref<1x128xf32, #tpu.memory_space<vmem>>, vector<1x128xf32>
    %18 = vector.broadcast %17 : vector<1x128xf32> to vector<128x128xf32>
    %19 = arith.mulf %16, %18 : vector<128x128xf32>
    %cst_14 = arith.constant dense<0.000000e+00> : vector<128xf32>
    %20 = vector.multi_reduction <add>, %19, %cst_14 [1] : vector<128x128xf32> to vector<128xf32>
    %21 = vector.shape_cast %20 : vector<128xf32> to vector<1x128xf32>
    %c0_15 = arith.constant 0 : index
    %c0_16 = arith.constant 0 : index
    %22 = vector.load %arg7[%c0_15, %c0_16] : memref<1x1xf32, #tpu.memory_space<vmem>>, vector<1x1xf32>
    %23 = vector.broadcast %22 : vector<1x1xf32> to vector<1x128xf32>
    %24 = arith.addf %21, %23 : vector<1x128xf32>
    %25 = arith.negf %24 : vector<1x128xf32>
    %26 = math.exp %25 : vector<1x128xf32>
    %cst_17 = arith.constant 1.000000e+00 : f32
    %27 = vector.broadcast %cst_17 : f32 to vector<1x128xf32>
    %28 = arith.addf %27, %26 : vector<1x128xf32>
    %29 = arith.divf %27, %28 : vector<1x128xf32>
    %c0_18 = arith.constant 0 : index
    %c0_19 = arith.constant 0 : index
    %30 = vector.load %arg8[%c0_18, %c0_19] : memref<1x128xf32, #tpu.memory_space<vmem>>, vector<1x128xf32>
    tpu.vector_store %arg8[%c0_18, %c0_19], %29 {strides = array<i32>} : memref<1x128xf32, #tpu.memory_space<vmem>>, vector<1x128xf32>,
    return
  }
  func.func @transform_0(%arg0: i32) -> (i32, i32) {
    %c0_i32 = arith.constant 0 : i32
    %c0_i32_0 = arith.constant 0 : i32
    return %arg0, %c0_i32 : i32, i32
  }
  func.func @transform_1(%arg0: i32) -> (i32, i32) {
    %c0_i32 = arith.constant 0 : i32
    %c0_i32_0 = arith.constant 0 : i32
    %c0_i32_1 = arith.constant 0 : i32
    return %c0_i32, %c0_i32_0 : i32, i32
  }
  func.func @transform_2(%arg0: i32) -> (i32, i32) {
    %c0_i32 = arith.constant 0 : i32
    %c0_i32_0 = arith.constant 0 : i32
    %c0_i32_1 = arith.constant 0 : i32
    return %c0_i32, %c0_i32_0 : i32, i32
  }
  func.func @transform_3(%arg0: i32) -> (i32, i32) {
    %c0_i32 = arith.constant 0 : i32
    %c0_i32_0 = arith.constant 0 : i32
    %c0_i32_1 = arith.constant 0 : i32
    return %c0_i32, %c0_i32_0 : i32, i32
  }
  func.func @transform_4(%arg0: i32) -> (i32, i32) {
    %c0_i32 = arith.constant 0 : i32
    %c0_i32_0 = arith.constant 0 : i32
    %c0_i32_1 = arith.constant 0 : i32
    return %c0_i32, %c0_i32_0 : i32, i32
  }
  func.func @transform_5(%arg0: i32) -> (i32, i32) {
    %c0_i32 = arith.constant 0 : i32
    %c0_i32_0 = arith.constant 0 : i32
    %c0_i32_1 = arith.constant 0 : i32
    return %c0_i32, %c0_i32_0 : i32, i32
  }
  func.func @transform_6(%arg0: i32) -> (i32, i32) {
    %c0_i32 = arith.constant 0 : i32
    %c0_i32_0 = arith.constant 0 : i32
    %c0_i32_1 = arith.constant 0 : i32
    return %c0_i32, %c0_i32_0 : i32, i32
  }
  func.func @transform_7(%arg0: i32) -> (i32, i32) {
    %c0_i32 = arith.constant 0 : i32
    %c0_i32_0 = arith.constant 0 : i32
    return %c0_i32, %arg0 : i32, i32
  }
}

</mosaic_0001>

<llo_original>
// kernel: tpu_custom_call.1
$region0: #{tpu_custom_call.1}
  #allocation0 [shape = 'u32[]', space=smem, size = 0x4, offset = 0x4, fixed_abs, tag = 'smem constant byte address 0x4 - core index']
  #allocation1 [shape = 'u32[144,128]{1,0:T(1,128)}', space=vmem, size = 0x12000, scoped, tag = 'internal scratch']
  #allocation2 [shape = 'f32[1,1]{1,0:T(1,128)S(1)}', space=vmem, size = 0x200, scoped, tag = 'scoped memory for tpu_custom_call.1']
  %s0 = inlined_call_operand.hbm [shape: f32[8,32], index: 0, kind: input, shape index: {}]
  %s1 = inlined_call_operand.hbm [shape: bf16[32,128], index: 1, kind: input, shape index: {}]
  %s2 = inlined_call_operand.vmem [shape: f32[1,128], index: 2, kind: input, shape index: {}]
  %s3 = inlined_call_operand.hbm [shape: bf16[128,128], index: 3, kind: input, shape index: {}]
  %s4 = inlined_call_operand.vmem [shape: f32[1,128], index: 4, kind: input, shape index: {}]
  %s5 = inlined_call_operand.vmem [shape: f32[1,128], index: 5, kind: input, shape index: {}]
  %s6 = inlined_call_operand.<no memory space> [shape: f32[1,1], index: 6, kind: input, shape index: {}]
  %s7 = inlined_call_operand.hbm [shape: f32[1,8], index: 7, kind: output, shape index: {}]
  %s8 = sld [smem:[#allocation0]]
  $region50: #{tpu_custom_call.1} parent=0
    _
  %s10 = ssub.s32 1, %s8
  %s11 = scalar_select 0, %s10, %s8
  %v12 = vstv %s6
  %13 = vst [vmem:[#allocation2] sm:$0x1] %v12
  $region1: #{tpu_custom_call.1} parent=0
    #allocation3 [shape = 'u8[65536]{0}', space=vmem, size = 0x10000, scoped, tag = 'input window, operand 0, single buffered']
    #allocation4 [shape = 's32[1]{0}', space=sflag, size = 0x4, scoped, tag = 'scoped memory for tpu_custom_call.1']
    #allocation5 [shape = 's32[1]{0}', space=sflag, size = 0x4, scoped, tag = 'scoped memory for tpu_custom_call.1']
    #allocation6 [shape = 'u8[8192]{0}', space=vmem, size = 0x2000, scoped, tag = 'input window, operand 1, single buffered']
    #allocation7 [shape = 's32[1]{0}', space=sflag, size = 0x4, scoped, tag = 'scoped memory for tpu_custom_call.1']
    #allocation8 [shape = 'u8[32768]{0}', space=vmem, size = 0x8000, scoped, tag = 'input window, operand 3, single buffered']
    #allocation9 [shape = 'u8[512]{0}', space=vmem, size = 0x400, scoped, tag = 'output window, operand 0, single buffered']
    %14 = vsyncpa [#allocation4], 0
    %15 = vsyncpa [#allocation7], 0
    %16 = vsyncpa [#allocation5], 0
    // Predicated region
    $region2: #{tpu_custom_call.1} parent=1 // pred_check
      _
    $region3: #{tpu_custom_call.1} parent=1 // pred_check_branch
      %18 = sbr.rel (0) target = $region5
    $region4: #{tpu_custom_call.1} parent=1 // pred_region
      %s20 = ssub.s32 2048, 128
      %21 = vsyncadd [#allocation4], %s20
      %s22 = sshll.u32 [#allocation3], 4
      %s23 = int_to_ptr.vmem [resolvable:$true] %s22
      %28 = dma.hbm_to_vmem [thread:$0]  %s0, 128, %s23, [#allocation4], 128, 128, 8
    $region5: #{tpu_custom_call.1} parent=1 // pred_fallthru
      _
    // Predicated region
    $region6: #{tpu_custom_call.1} parent=1 // pred_check
      _
    $region7: #{tpu_custom_call.1} parent=1 // pred_check_branch
      %30 = sbr.rel (0) target = $region9
    $region8: #{tpu_custom_call.1} parent=1 // pred_region
      %s32 = ssub.s32 256, 256
      %33 = vsyncadd [#allocation7], %s32
      %s34 = sshll.u32 [#allocation6], 4
      %s35 = int_to_ptr.vmem [resolvable:$true] %s34
      %40 = dma.hbm_to_vmem [thread:$0]  %s1, 256, %s35, [#allocation7], 64, 64, 4
    $region9: #{tpu_custom_call.1} parent=1 // pred_fallthru
      _
    // Predicated region
    $region10: #{tpu_custom_call.1} parent=1 // pred_check
      _
    $region11: #{tpu_custom_call.1} parent=1 // pred_check_branch
      %42 = sbr.rel (0) target = $region13
    $region12: #{tpu_custom_call.1} parent=1 // pred_region
      _
    $region13: #{tpu_custom_call.1} parent=1 // pred_fallthru
      _
    // Predicated region
    $region14: #{tpu_custom_call.1} parent=1 // pred_check
      _
    $region15: #{tpu_custom_call.1} parent=1 // pred_check_branch
      %44 = sbr.rel (0) target = $region17
    $region16: #{tpu_custom_call.1} parent=1 // pred_region
      %s46 = ssub.s32 1024, 1024
      %47 = vsyncadd [#allocation7], %s46
      %s48 = sshll.u32 [#allocation8], 4
      %s49 = int_to_ptr.vmem [resolvable:$true] %s48
      %54 = dma.hbm_to_vmem [thread:$0]  %s3, 1024, %s49, [#allocation7], 64, 64, 4
    $region17: #{tpu_custom_call.1} parent=1 // pred_fallthru
      _
    // Predicated region
    $region18: #{tpu_custom_call.1} parent=1 // pred_check
      _
    $region19: #{tpu_custom_call.1} parent=1 // pred_check_branch
      %56 = sbr.rel (0) target = $region21
    $region20: #{tpu_custom_call.1} parent=1 // pred_region
      _
    $region21: #{tpu_custom_call.1} parent=1 // pred_fallthru
      _
    // Predicated region
    $region22: #{tpu_custom_call.1} parent=1 // pred_check
      _
    $region23: #{tpu_custom_call.1} parent=1 // pred_check_branch
      %58 = sbr.rel (0) target = $region25
    $region24: #{tpu_custom_call.1} parent=1 // pred_region
      _
    $region25: #{tpu_custom_call.1} parent=1 // pred_fallthru
      _
    // Predicated region
    $region26: #{tpu_custom_call.1} parent=1 // pred_check
      _
    $region27: #{tpu_custom_call.1} parent=1 // pred_check_branch
      %60 = sbr.rel (0) target = $region29
    $region28: #{tpu_custom_call.1} parent=1 // pred_region
      _
    $region29: #{tpu_custom_call.1} parent=1 // pred_fallthru
      _
    // Predicated region
    $region30: #{tpu_custom_call.1} parent=1 // pred_check
      _
    $region31: #{tpu_custom_call.1} parent=1 // pred_check_branch
      %62 = sbr.rel (0) target = $region33
    $region32: #{tpu_custom_call.1} parent=1 // pred_region
      %63 = dma.done [#allocation4], 2048
    $region33: #{tpu_custom_call.1} parent=1 // pred_fallthru
      _
    // Predicated region
    $region34: #{tpu_custom_call.1} parent=1 // pred_check
      _
    $region35: #{tpu_custom_call.1} parent=1 // pred_check_branch
      %65 = sbr.rel (0) target = $region37
    $region36: #{tpu_custom_call.1} parent=1 // pred_region
      %66 = dma.done [#allocation7], 256
    $region37: #{tpu_custom_call.1} parent=1 // pred_fallthru
      _
    // Predicated region
    $region38: #{tpu_custom_call.1} parent=1 // pred_check
      _
    $region39: #{tpu_custom_call.1} parent=1 // pred_check_branch
      %68 = sbr.rel (0) target = $region41
    $region40: #{tpu_custom_call.1} parent=1 // pred_region
      %69 = dma.done [#allocation7], 1024
    $region41: #{tpu_custom_call.1} parent=1 // pred_fallthru
      _
    %v71 = vld [vmem:[#allocation3] sm:$0xff]
    %v72 = vld [vmem:[#allocation3 + $0x8] sm:$0xff]
    %v73 = vld [vmem:[#allocation3 + $0x10] sm:$0xff]
    %v74 = vld [vmem:[#allocation3 + $0x18] sm:$0xff]
    %v75 = vld [vmem:[#allocation3 + $0x20] sm:$0xff]
    %v76 = vld [vmem:[#allocation3 + $0x28] sm:$0xff]
    %v77 = vld [vmem:[#allocation3 + $0x30] sm:$0xff]
    %v78 = vld [vmem:[#allocation3 + $0x38] sm:$0xff]
    %v79 = vld [vmem:[#allocation3 + $0x40] sm:$0xff]
    %v80 = vld [vmem:[#allocation3 + $0x48] sm:$0xff]
    %v81 = vld [vmem:[#allocation3 + $0x50] sm:$0xff]
    %v82 = vld [vmem:[#allocation3 + $0x58] sm:$0xff]
    %v83 = vld [vmem:[#allocation3 + $0x60] sm:$0xff]
    %v84 = vld [vmem:[#allocation3 + $0x68] sm:$0xff]
    %v85 = vld [vmem:[#allocation3 + $0x70] sm:$0xff]
    %v86 = vld [vmem:[#allocation3 + $0x78] sm:$0xff]
    %v87 = vpack.c.bf16 %v72, %v71
    %v88 = vpack.c.bf16 %v74, %v73
    %v89 = vpack.c.bf16 %v76, %v75
    %v90 = vpack.c.bf16 %v78, %v77
    %v91 = vpack.c.bf16 %v80, %v79
    %v92 = vpack.c.bf16 %v82, %v81
    %v93 = vpack.c.bf16 %v84, %v83
    %v94 = vpack.c.bf16 %v86, %v85
    %v95 = vld [vmem:[#allocation6] sm:$0xf]
    %v96 = vld [vmem:[#allocation6 + $0x4] sm:$0xf]
    %v97 = vld [vmem:[#allocation6 + $0x8] sm:$0xf]
    %v98 = vld [vmem:[#allocation6 + $0xc] sm:$0xf]
    %v99 = vld [vmem:[%s2] sm:$0x1]
    %v101 = vlaneseq
    %v102 = vshrl.u32 %v101, 7
    %v103 = vsub.s32 0, %v102
    %v104 = vrot.slane %v99, %v103
    %v110 = vunpack.c.l.b16 %v95
    %v111 = vunpack.c.l.b16 %v96
    %v112 = vunpack.c.l.b16 %v97
    %v113 = vunpack.c.l.b16 %v98
    %v114 = vpack.c.b16 %v111, %v110
    %v115 = vpack.c.b16 %v113, %v112
    %vm118 = vcmask 261120
    %v120 = vsel %vm118, %v87, 0
    %v123 = vsel %vm118, %v88, 0
    %v126 = vsel %vm118, %v89, 0
    %v129 = vsel %vm118, %v90, 0
    %v132 = vsel %vm118, %v91, 0
    %v135 = vsel %vm118, %v92, 0
    %v138 = vsel %vm118, %v93, 0
    %v141 = vsel %vm118, %v94, 0
    %143 = vmatprep.subr.bf16.mxu0 0
    %144 = vmatpush1.bf16.msra.mxu0 %v114
    %145 = vmatprep.subr.bf16.mxu0 0
    %146 = vmatpush1.bf16.msra.mxu0 %v115
    %147 = vmatprep.subr.bf16.mxu0 0
    %148 = vmatpush1.bf16.msra.mxu0 0
    %149 = vmatprep.subr.bf16.mxu0 0
    %150 = vmatpush1.bf16.msra.mxu0 0
    %151 = vmatprep.subr.bf16.mxu0 0
    %152 = vmatpush1.bf16.msra.mxu0 0
    %153 = vmatprep.subr.bf16.mxu0 0
    %154 = vmatpush1.bf16.msra.mxu0 0
    %155 = vmatprep.subr.bf16.mxu0 0
    %156 = vmatpush1.bf16.msra.mxu0 0
    %157 = vmatprep.subr.bf16.mxu0 0
    %158 = vmatpush1.bf16.msra.mxu0 0
    %159 = vmatprep.subr.bf16.mxu0 0
    %160 = vmatpush1.bf16.msra.mxu0 0
    %161 = vmatprep.subr.bf16.mxu0 0
    %162 = vmatpush1.bf16.msra.mxu0 0
    %163 = vmatprep.subr.bf16.mxu0 0
    %164 = vmatpush1.bf16.msra.mxu0 0
    %165 = vmatprep.subr.bf16.mxu0 0
    %166 = vmatpush1.bf16.msra.mxu0 0
    %167 = vmatprep.subr.bf16.mxu0 0
    %168 = vmatpush1.bf16.msra.mxu0 0
    %169 = vmatprep.subr.bf16.mxu0 0
    %170 = vmatpush1.bf16.msra.mxu0 0
    %171 = vmatprep.subr.bf16.mxu0 0
    %172 = vmatpush1.bf16.msra.mxu0 0
    %173 = vmatprep.subr.bf16.mxu0 0
    %174 = vmatpush1.bf16.msra.mxu0 0
    %175 = vmatprep.mubr.bf16.mxu0 0
    %176 = vmatmul.mubr.bf16.gmra.mrb[0].mxu0 %v120
    %v177 = vpop.f32.mrb[0].mxu0
    %v178 = vadd.f32 %v104, %v177
    %v179 = vpop.f32.mrb[0].mxu0
    %v180 = vpop.f32.mrb[0].mxu0
    %v181 = vadd.f32 %v104, %v180
    %v182 = vpop.f32.mrb[0].mxu0
    %183 = vmatprep.mubr.bf16.mxu0 0
    %184 = vmatmul.mubr.bf16.gmra.mrb[0].mxu0 %v123
    %v185 = vpop.f32.mrb[0].mxu0
    %v186 = vadd.f32 %v104, %v185
    %v187 = vpop.f32.mrb[0].mxu0
    %v188 = vpop.f32.mrb[0].mxu0
    %v189 = vadd.f32 %v104, %v188
    %v190 = vpop.f32.mrb[0].mxu0
    %191 = vmatprep.mubr.bf16.mxu0 0
    %192 = vmatmul.mubr.bf16.gmra.mrb[0].mxu0 %v126
    %v193 = vpop.f32.mrb[0].mxu0
    %v194 = vadd.f32 %v104, %v193
    %v195 = vpop.f32.mrb[0].mxu0
    %v196 = vpop.f32.mrb[0].mxu0
    %v197 = vadd.f32 %v104, %v196
    %v198 = vpop.f32.mrb[0].mxu0
    %199 = vmatprep.mubr.bf16.mxu0 0
    %200 = vmatmul.mubr.bf16.gmra.mrb[0].mxu0 %v129
    %v201 = vpop.f32.mrb[0].mxu0
    %v202 = vadd.f32 %v104, %v201
    %v203 = vpop.f32.mrb[0].mxu0
    %v204 = vpop.f32.mrb[0].mxu0
    %v205 = vadd.f32 %v104, %v204
    %v206 = vpop.f32.mrb[0].mxu0
    %207 = vmatprep.mubr.bf16.mxu0 0
    %208 = vmatmul.mubr.bf16.gmra.mrb[0].mxu0 %v132
    %v209 = vpop.f32.mrb[0].mxu0
    %v210 = vadd.f32 %v104, %v209
    %v211 = vpop.f32.mrb[0].mxu0
    %v212 = vpop.f32.mrb[0].mxu0
    %v213 = vadd.f32 %v104, %v212
    %v214 = vpop.f32.mrb[0].mxu0
    %215 = vmatprep.mubr.bf16.mxu0 0
    %216 = vmatmul.mubr.bf16.gmra.mrb[0].mxu0 %v135
    %v217 = vpop.f32.mrb[0].mxu0
    %v218 = vadd.f32 %v104, %v217
    %v219 = vpop.f32.mrb[0].mxu0
    %v220 = vpop.f32.mrb[0].mxu0
    %v221 = vadd.f32 %v104, %v220
    %v222 = vpop.f32.mrb[0].mxu0
    %223 = vmatprep.mubr.bf16.mxu0 0
    %224 = vmatmul.mubr.bf16.gmra.mrb[0].mxu0 %v138
    %v225 = vpop.f32.mrb[0].mxu0
    %v226 = vadd.f32 %v104, %v225
    %v227 = vpop.f32.mrb[0].mxu0
    %v228 = vpop.f32.mrb[0].mxu0
    %v229 = vadd.f32 %v104, %v228
    %v230 = vpop.f32.mrb[0].mxu0
    %231 = vmatprep.mubr.bf16.mxu0 0
    %232 = vmatmul.mubr.bf16.gmra.mrb[0].mxu0 %v141
    %v233 = vpop.f32.mrb[0].mxu0
    %v234 = vadd.f32 %v104, %v233
    %v235 = vpop.f32.mrb[0].mxu0
    %v236 = vpop.f32.mrb[0].mxu0
    %v237 = vadd.f32 %v104, %v236
    %v238 = vpop.f32.mrb[0].mxu0
    %239 = vdwg.mxu0
    %v240 = vmax.f32 %v178, 0.0
    %v241 = vmax.f32 %v181, 0.0
    %v242 = vmax.f32 %v186, 0.0
    %v243 = vmax.f32 %v189, 0.0
    %v244 = vmax.f32 %v194, 0.0
    %v245 = vmax.f32 %v197, 0.0
    %v246 = vmax.f32 %v202, 0.0
    %v247 = vmax.f32 %v205, 0.0
    %v248 = vmax.f32 %v210, 0.0
    %v249 = vmax.f32 %v213, 0.0
    %v250 = vmax.f32 %v218, 0.0
    %v251 = vmax.f32 %v221, 0.0
    %v252 = vmax.f32 %v226, 0.0
    %v253 = vmax.f32 %v229, 0.0
    %v254 = vmax.f32 %v234, 0.0
    %v255 = vmax.f32 %v237, 0.0
    %v256 = vpack.c.bf16 %v241, %v240
    %v257 = vpack.c.bf16 %v243, %v242
    %v258 = vpack.c.bf16 %v245, %v244
    %v259 = vpack.c.bf16 %v247, %v246
    %v260 = vpack.c.bf16 %v249, %v248
    %v261 = vpack.c.bf16 %v251, %v250
    %v262 = vpack.c.bf16 %v253, %v252
    %v263 = vpack.c.bf16 %v255, %v254
    %v264 = vld [vmem:[#allocation8] sm:$0xf]
    %v265 = vld [vmem:[#allocation8 + $0x4] sm:$0xf]
    %v266 = vld [vmem:[#allocation8 + $0x8] sm:$0xf]
    %v267 = vld [vmem:[#allocation8 + $0xc] sm:$0xf]
    %v268 = vld [vmem:[#allocation8 + $0x10] sm:$0xf]
    %v269 = vld [vmem:[#allocation8 + $0x14] sm:$0xf]
    %v270 = vld [vmem:[#allocation8 + $0x18] sm:$0xf]
    %v271 = vld [vmem:[#allocation8 + $0x1c] sm:$0xf]
    %v272 = vld [vmem:[#allocation8 + $0x20] sm:$0xf]
    %v273 = vld [vmem:[#allocation8 + $0x24] sm:$0xf]
    %v274 = vld [vmem:[#allocation8 + $0x28] sm:$0xf]
    %v275 = vld [vmem:[#allocation8 + $0x2c] sm:$0xf]
    %v276 = vld [vmem:[#allocation8 + $0x30] sm:$0xf]
    %v277 = vld [vmem:[#allocation8 + $0x34] sm:$0xf]
    %v278 = vld [vmem:[#allocation8 + $0x38] sm:$0xf]
    %v279 = vld [vmem:[#allocation8 + $0x3c] sm:$0xf]
    %v280 = vld [vmem:[%s4] sm:$0x1]
    %v282 = vlaneseq
    %v283 = vshrl.u32 %v282, 7
    %v284 = vsub.s32 0, %v283
    %v285 = vrot.slane %v280, %v284
    %v303 = vunpack.c.l.b16 %v264
    %v304 = vunpack.c.l.b16 %v265
    %v305 = vunpack.c.l.b16 %v266
    %v306 = vunpack.c.l.b16 %v267
    %v307 = vunpack.c.l.b16 %v268
    %v308 = vunpack.c.l.b16 %v269
    %v309 = vunpack.c.l.b16 %v270
    %v310 = vunpack.c.l.b16 %v271
    %v311 = vunpack.c.l.b16 %v272
    %v312 = vunpack.c.l.b16 %v273
    %v313 = vunpack.c.l.b16 %v274
    %v314 = vunpack.c.l.b16 %v275
    %v315 = vunpack.c.l.b16 %v276
    %v316 = vunpack.c.l.b16 %v277
    %v317 = vunpack.c.l.b16 %v278
    %v318 = vunpack.c.l.b16 %v279
    %v319 = vpack.c.b16 %v304, %v303
    %v320 = vpack.c.b16 %v306, %v305
    %v321 = vpack.c.b16 %v308, %v307
    %v322 = vpack.c.b16 %v310, %v309
    %v323 = vpack.c.b16 %v312, %v311
    %v324 = vpack.c.b16 %v314, %v313
    %v325 = vpack.c.b16 %v316, %v315
    %v326 = vpack.c.b16 %v318, %v317
    %335 = vmatprep.subr.bf16.mxu0 0
    %336 = vmatpush1.bf16.msra.mxu0 %v319
    %337 = vmatprep.subr.bf16.mxu0 0
    %338 = vmatpush1.bf16.msra.mxu0 %v320
    %339 = vmatprep.subr.bf16.mxu0 0
    %340 = vmatpush1.bf16.msra.mxu0 %v321
    %341 = vmatprep.subr.bf16.mxu0 0
    %342 = vmatpush1.bf16.msra.mxu0 %v322
    %343 = vmatprep.subr.bf16.mxu0 0
    %344 = vmatpush1.bf16.msra.mxu0 %v323
    %345 = vmatprep.subr.bf16.mxu0 0
    %346 = vmatpush1.bf16.msra.mxu0 %v324
    %347 = vmatprep.subr.bf16.mxu0 0
    %348 = vmatpush1.bf16.msra.mxu0 %v325
    %349 = vmatprep.subr.bf16.mxu0 0
    %350 = vmatpush1.bf16.msra.mxu0 %v326
    %351 = vmatprep.subr.bf16.mxu0 0
    %352 = vmatpush1.bf16.msra.mxu0 0
    %353 = vmatprep.subr.bf16.mxu0 0
    %354 = vmatpush1.bf16.msra.mxu0 0
    %355 = vmatprep.subr.bf16.mxu0 0
    %356 = vmatpush1.bf16.msra.mxu0 0
    %357 = vmatprep.subr.bf16.mxu0 0
    %358 = vmatpush1.bf16.msra.mxu0 0
    %359 = vmatprep.subr.bf16.mxu0 0
    %360 = vmatpush1.bf16.msra.mxu0 0
    %361 = vmatprep.subr.bf16.mxu0 0
    %362 = vmatpush1.bf16.msra.mxu0 0
    %363 = vmatprep.subr.bf16.mxu0 0
    %364 = vmatpush1.bf16.msra.mxu0 0
    %365 = vmatprep.subr.bf16.mxu0 0
    %366 = vmatpush1.bf16.msra.mxu0 0
    %367 = vmatprep.mubr.bf16.mxu0 0
    %368 = vmatmul.mubr.bf16.gmra.mrb[0].mxu0 %v256
    %v369 = vpop.f32.mrb[0].mxu0
    %v370 = vadd.f32 %v285, %v369
    %v371 = vpop.f32.mrb[0].mxu0
    %v372 = vpop.f32.mrb[0].mxu0
    %v373 = vadd.f32 %v285, %v372
    %v374 = vpop.f32.mrb[0].mxu0
    %375 = vmatprep.mubr.bf16.mxu0 0
    %376 = vmatmul.mubr.bf16.gmra.mrb[0].mxu0 %v257
    %v377 = vpop.f32.mrb[0].mxu0
    %v378 = vadd.f32 %v285, %v377
    %v379 = vpop.f32.mrb[0].mxu0
    %v380 = vpop.f32.mrb[0].mxu0
    %v381 = vadd.f32 %v285, %v380
    %v382 = vpop.f32.mrb[0].mxu0
    %383 = vmatprep.mubr.bf16.mxu0 0
    %384 = vmatmul.mubr.bf16.gmra.mrb[0].mxu0 %v258
    %v385 = vpop.f32.mrb[0].mxu0
    %v386 = vadd.f32 %v285, %v385
    %v387 = vpop.f32.mrb[0].mxu0
    %v388 = vpop.f32.mrb[0].mxu0
    %v389 = vadd.f32 %v285, %v388
    %v390 = vpop.f32.mrb[0].mxu0
    %391 = vmatprep.mubr.bf16.mxu0 0
    %392 = vmatmul.mubr.bf16.gmra.mrb[0].mxu0 %v259
    %v393 = vpop.f32.mrb[0].mxu0
    %v394 = vadd.f32 %v285, %v393
    %v395 = vpop.f32.mrb[0].mxu0
    %v396 = vpop.f32.mrb[0].mxu0
    %v397 = vadd.f32 %v285, %v396
    %v398 = vpop.f32.mrb[0].mxu0
    %399 = vmatprep.mubr.bf16.mxu0 0
    %400 = vmatmul.mubr.bf16.gmra.mrb[0].mxu0 %v260
    %v401 = vpop.f32.mrb[0].mxu0
    %v402 = vadd.f32 %v285, %v401
    %v403 = vpop.f32.mrb[0].mxu0
    %v404 = vpop.f32.mrb[0].mxu0
    %v405 = vadd.f32 %v285, %v404
    %v406 = vpop.f32.mrb[0].mxu0
    %407 = vmatprep.mubr.bf16.mxu0 0
    %408 = vmatmul.mubr.bf16.gmra.mrb[0].mxu0 %v261
    %v409 = vpop.f32.mrb[0].mxu0
    %v410 = vadd.f32 %v285, %v409
    %v411 = vpop.f32.mrb[0].mxu0
    %v412 = vpop.f32.mrb[0].mxu0
    %v413 = vadd.f32 %v285, %v412
    %v414 = vpop.f32.mrb[0].mxu0
    %415 = vmatprep.mubr.bf16.mxu0 0
    %416 = vmatmul.mubr.bf16.gmra.mrb[0].mxu0 %v262
    %v417 = vpop.f32.mrb[0].mxu0
    %v418 = vadd.f32 %v285, %v417
    %v419 = vpop.f32.mrb[0].mxu0
    %v420 = vpop.f32.mrb[0].mxu0
    %v421 = vadd.f32 %v285, %v420
    %v422 = vpop.f32.mrb[0].mxu0
    %423 = vmatprep.mubr.bf16.mxu0 0
    %424 = vmatmul.mubr.bf16.gmra.mrb[0].mxu0 %v263
    %v425 = vpop.f32.mrb[0].mxu0
    %v426 = vadd.f32 %v285, %v425
    %v427 = vpop.f32.mrb[0].mxu0
    %v428 = vpop.f32.mrb[0].mxu0
    %v429 = vadd.f32 %v285, %v428
    %v430 = vpop.f32.mrb[0].mxu0
    %431 = vdwg.mxu0
    %v432 = vmax.f32 %v370, 0.0
    %v433 = vmax.f32 %v373, 0.0
    %v434 = vmax.f32 %v378, 0.0
    %v435 = vmax.f32 %v381, 0.0
    %v436 = vmax.f32 %v386, 0.0
    %v437 = vmax.f32 %v389, 0.0
    %v438 = vmax.f32 %v394, 0.0
    %v439 = vmax.f32 %v397, 0.0
    %v440 = vmax.f32 %v402, 0.0
    %v441 = vmax.f32 %v405, 0.0
    %v442 = vmax.f32 %v410, 0.0
    %v443 = vmax.f32 %v413, 0.0
    %v444 = vmax.f32 %v418, 0.0
    %v445 = vmax.f32 %v421, 0.0
    %v446 = vmax.f32 %v426, 0.0
    %v447 = vmax.f32 %v429, 0.0
    %v448 = vld [vmem:[%s5] sm:$0x1]
    %v450 = vlaneseq
    %v451 = vshrl.u32 %v450, 7
    %v452 = vsub.s32 0, %v451
    %v453 = vrot.slane %v448, %v452
    %v455 = vmul.f32 %v432, %v453
    %v456 = vmul.f32 %v433, %v453
    %v457 = vmul.f32 %v434, %v453
    %v458 = vmul.f32 %v435, %v453
    %v459 = vmul.f32 %v436, %v453
    %v460 = vmul.f32 %v437, %v453
    %v461 = vmul.f32 %v438, %v453
    %v462 = vmul.f32 %v439, %v453
    %v463 = vmul.f32 %v440, %v453
    %v464 = vmul.f32 %v441, %v453
    %v465 = vmul.f32 %v442, %v453
    %v466 = vmul.f32 %v443, %v453
    %v467 = vmul.f32 %v444, %v453
    %v468 = vmul.f32 %v445, %v453
    %v469 = vmul.f32 %v446, %v453
    %v470 = vmul.f32 %v447, %v453
    %471 = vadd.xlane.f32.xlu0 %v455
    %v472 = vpop.xlane.xlu0 %471
    %473 = vadd.xlane.f32.xlu0 %v456
    %v474 = vpop.xlane.xlu0 %473
    %475 = vadd.xlane.f32.xlu0 %v457
    %v476 = vpop.xlane.xlu0 %475
    %477 = vadd.xlane.f32.xlu0 %v458
    %v478 = vpop.xlane.xlu0 %477
    %479 = vadd.xlane.f32.xlu0 %v459
    %v480 = vpop.xlane.xlu0 %479
    %481 = vadd.xlane.f32.xlu0 %v460
    %v482 = vpop.xlane.xlu0 %481
    %483 = vadd.xlane.f32.xlu0 %v461
    %v484 = vpop.xlane.xlu0 %483
    %485 = vadd.xlane.f32.xlu0 %v462
    %v486 = vpop.xlane.xlu0 %485
    %487 = vadd.xlane.f32.xlu0 %v463
    %v488 = vpop.xlane.xlu0 %487
    %489 = vadd.xlane.f32.xlu0 %v464
    %v490 = vpop.xlane.xlu0 %489
    %491 = vadd.xlane.f32.xlu0 %v465
    %v492 = vpop.xlane.xlu0 %491
    %493 = vadd.xlane.f32.xlu0 %v466
    %v494 = vpop.xlane.xlu0 %493
    %495 = vadd.xlane.f32.xlu0 %v467
    %v496 = vpop.xlane.xlu0 %495
    %497 = vadd.xlane.f32.xlu0 %v468
    %v498 = vpop.xlane.xlu0 %497
    %499 = vadd.xlane.f32.xlu0 %v469
    %v500 = vpop.xlane.xlu0 %499
    %501 = vadd.xlane.f32.xlu0 %v470
    %v502 = vpop.xlane.xlu0 %501
    %v503 = vld [vmem:[#allocation2] sm:$0x1]
    %505 = vset.pattern.permute.xlu0 0
    %506 = vperm.xlu0 %505, %v503
    %v507 = vpop.permute.xlu0 %506
    %v509 = vlaneseq
    %v510 = vshrl.u32 %v509, 7
    %v511 = vsub.s32 0, %v510
    %v512 = vrot.slane %v507, %v511
    %v513 = vadd.f32 %v472, %v512
    %v514 = vadd.f32 %v474, %v512
    %v515 = vadd.f32 %v476, %v512
    %v516 = vadd.f32 %v478, %v512
    %v517 = vadd.f32 %v480, %v512
    %v518 = vadd.f32 %v482, %v512
    %v519 = vadd.f32 %v484, %v512
    %v520 = vadd.f32 %v486, %v512
    %v521 = vadd.f32 %v488, %v512
    %v522 = vadd.f32 %v490, %v512
    %v523 = vadd.f32 %v492, %v512
    %v524 = vadd.f32 %v494, %v512
    %v525 = vadd.f32 %v496, %v512
    %v526 = vadd.f32 %v498, %v512
    %v527 = vadd.f32 %v500, %v512
    %v528 = vadd.f32 %v502, %v512
    %v529 = vxor.u32 %v513, 2147483648
    %v530 = vxor.u32 %v514, 2147483648
    %v531 = vxor.u32 %v515, 2147483648
    %v532 = vxor.u32 %v516, 2147483648
    %v533 = vxor.u32 %v517, 2147483648
    %v534 = vxor.u32 %v518, 2147483648
    %v535 = vxor.u32 %v519, 2147483648
    %v536 = vxor.u32 %v520, 2147483648
    %v537 = vxor.u32 %v521, 2147483648
    %v538 = vxor.u32 %v522, 2147483648
    %v539 = vxor.u32 %v523, 2147483648
    %v540 = vxor.u32 %v524, 2147483648
    %v541 = vxor.u32 %v525, 2147483648
    %v542 = vxor.u32 %v526, 2147483648
    %v543 = vxor.u32 %v527, 2147483648
    %v544 = vxor.u32 %v528, 2147483648
    %v545 = vmul.f32 %v529, 1.442695
    %v546 = vpow.pop %v545
    %v547 = vmul.f32 %v530, 1.442695
    %v548 = vpow.pop %v547
    %v549 = vmul.f32 %v531, 1.442695
    %v550 = vpow.pop %v549
    %v551 = vmul.f32 %v532, 1.442695
    %v552 = vpow.pop %v551
    %v553 = vmul.f32 %v533, 1.442695
    %v554 = vpow.pop %v553
    %v555 = vmul.f32 %v534, 1.442695
    %v556 = vpow.pop %v555
    %v557 = vmul.f32 %v535, 1.442695
    %v558 = vpow.pop %v557
    %v559 = vmul.f32 %v536, 1.442695
    %v560 = vpow.pop %v559
    %v561 = vmul.f32 %v537, 1.442695
    %v562 = vpow.pop %v561
    %v563 = vmul.f32 %v538, 1.442695
    %v564 = vpow.pop %v563
    %v565 = vmul.f32 %v539, 1.442695
    %v566 = vpow.pop %v565
    %v567 = vmul.f32 %v540, 1.442695
    %v568 = vpow.pop %v567
    %v569 = vmul.f32 %v541, 1.442695
    %v570 = vpow.pop %v569
    %v571 = vmul.f32 %v542, 1.442695
    %v572 = vpow.pop %v571
    %v573 = vmul.f32 %v543, 1.442695
    %v574 = vpow.pop %v573
    %v575 = vmul.f32 %v544, 1.442695
    %v576 = vpow.pop %v575
    %v577 = vadd.f32 %v546, 1.0
    %v578 = vadd.f32 %v548, 1.0
    %v579 = vadd.f32 %v550, 1.0
    %v580 = vadd.f32 %v552, 1.0
    %v581 = vadd.f32 %v554, 1.0
    %v582 = vadd.f32 %v556, 1.0
    %v583 = vadd.f32 %v558, 1.0
    %v584 = vadd.f32 %v560, 1.0
    %v585 = vadd.f32 %v562, 1.0
    %v586 = vadd.f32 %v564, 1.0
    %v587 = vadd.f32 %v566, 1.0
    %v588 = vadd.f32 %v568, 1.0
    %v589 = vadd.f32 %v570, 1.0
    %v590 = vadd.f32 %v572, 1.0
    %v591 = vadd.f32 %v574, 1.0
    %v592 = vadd.f32 %v576, 1.0
    %v593 = vrcp.pop %v577
    %v594 = vmul.f32 1.0, %v593
    %v595 = vrcp.pop %v578
    %v596 = vmul.f32 1.0, %v595
    %v597 = vrcp.pop %v579
    %v598 = vmul.f32 1.0, %v597
    %v599 = vrcp.pop %v580
    %v600 = vmul.f32 1.0, %v599
    %v601 = vrcp.pop %v581
    %v602 = vmul.f32 1.0, %v601
    %v603 = vrcp.pop %v582
    %v604 = vmul.f32 1.0, %v603
    %v605 = vrcp.pop %v583
    %v606 = vmul.f32 1.0, %v605
    %v607 = vrcp.pop %v584
    %v608 = vmul.f32 1.0, %v607
    %v609 = vrcp.pop %v585
    %v610 = vmul.f32 1.0, %v609
    %v611 = vrcp.pop %v586
    %v612 = vmul.f32 1.0, %v611
    %v613 = vrcp.pop %v587
    %v614 = vmul.f32 1.0, %v613
    %v615 = vrcp.pop %v588
    %v616 = vmul.f32 1.0, %v615
    %v617 = vrcp.pop %v589
    %v618 = vmul.f32 1.0, %v617
    %v619 = vrcp.pop %v590
    %v620 = vmul.f32 1.0, %v619
    %v621 = vrcp.pop %v591
    %v622 = vmul.f32 1.0, %v621
    %v623 = vrcp.pop %v592
    %v624 = vmul.f32 1.0, %v623
    %v641 = vlaneseq
    %v642 = vand.u32 %v641, 127
    %v643 = vlaneseq
    %v644 = vshrl.u32 %v643, 7
    %v645 = vsub.s32 %v642, %v644
    %v646 = vrot.slane %v594, %v645
    %v647 = vadd.s32 %v642, 4294967288
    %v648 = vlaneseq
    %v649 = vshrl.u32 %v648, 7
    %v650 = vsub.s32 %v647, %v649
    %v651 = vrot.slane %v596, %v650
    %vm652 = vcmask 130112
    %v653 = vsel %vm652, %v651, %v646
    %v654 = vadd.s32 %v642, 4294967280
    %v655 = vlaneseq
    %v656 = vshrl.u32 %v655, 7
    %v657 = vsub.s32 %v654, %v656
    %v658 = vrot.slane %v598, %v657
    %vm659 = vcmask 195712
    %v660 = vsel %vm659, %v658, %v653
    %v661 = vadd.s32 %v642, 4294967272
    %v662 = vlaneseq
    %v663 = vshrl.u32 %v662, 7
    %v664 = vsub.s32 %v661, %v663
    %v665 = vrot.slane %v600, %v664
    %vm666 = vcmask 261312
    %v667 = vsel %vm666, %v665, %v660
    %v668 = vadd.s32 %v642, 4294967264
    %v669 = vlaneseq
    %v670 = vshrl.u32 %v669, 7
    %v671 = vsub.s32 %v668, %v670
    %v672 = vrot.slane %v602, %v671
    %vm673 = vcmask 326912
    %v674 = vsel %vm673, %v672, %v667
    %v675 = vadd.s32 %v642, 4294967256
    %v676 = vlaneseq
    %v677 = vshrl.u32 %v676, 7
    %v678 = vsub.s32 %v675, %v677
    %v679 = vrot.slane %v604, %v678
    %vm680 = vcmask 392512
    %v681 = vsel %vm680, %v679, %v674
    %v682 = vadd.s32 %v642, 4294967248
    %v683 = vlaneseq
    %v684 = vshrl.u32 %v683, 7
    %v685 = vsub.s32 %v682, %v684
    %v686 = vrot.slane %v606, %v685
    %vm687 = vcmask 458112
    %v688 = vsel %vm687, %v686, %v681
    %v689 = vadd.s32 %v642, 4294967240
    %v690 = vlaneseq
    %v691 = vshrl.u32 %v690, 7
    %v692 = vsub.s32 %v689, %v691
    %v693 = vrot.slane %v608, %v692
    %vm694 = vcmask 523712
    %v695 = vsel %vm694, %v693, %v688
    %v696 = vadd.s32 %v642, 4294967232
    %v697 = vlaneseq
    %v698 = vshrl.u32 %v697, 7
    %v699 = vsub.s32 %v696, %v698
    %v700 = vrot.slane %v610, %v699
    %vm701 = vcmask 589312
    %v702 = vsel %vm701, %v700, %v695
    %v703 = vadd.s32 %v642, 4294967224
    %v704 = vlaneseq
    %v705 = vshrl.u32 %v704, 7
    %v706 = vsub.s32 %v703, %v705
    %v707 = vrot.slane %v612, %v706
    %vm708 = vcmask 654912
    %v709 = vsel %vm708, %v707, %v702
    %v710 = vadd.s32 %v642, 4294967216
    %v711 = vlaneseq
    %v712 = vshrl.u32 %v711, 7
    %v713 = vsub.s32 %v710, %v712
    %v714 = vrot.slane %v614, %v713
    %vm715 = vcmask 720512
    %v716 = vsel %vm715, %v714, %v709
    %v717 = vadd.s32 %v642, 4294967208
    %v718 = vlaneseq
    %v719 = vshrl.u32 %v718, 7
    %v720 = vsub.s32 %v717, %v719
    %v721 = vrot.slane %v616, %v720
    %vm722 = vcmask 786112
    %v723 = vsel %vm722, %v721, %v716
    %v724 = vadd.s32 %v642, 4294967200
    %v725 = vlaneseq
    %v726 = vshrl.u32 %v725, 7
    %v727 = vsub.s32 %v724, %v726
    %v728 = vrot.slane %v618, %v727
    %vm729 = vcmask 851712
    %v730 = vsel %vm729, %v728, %v723
    %v731 = vadd.s32 %v642, 4294967192
    %v732 = vlaneseq
    %v733 = vshrl.u32 %v732, 7
    %v734 = vsub.s32 %v731, %v733
    %v735 = vrot.slane %v620, %v734
    %vm736 = vcmask 917312
    %v737 = vsel %vm736, %v735, %v730
    %v738 = vadd.s32 %v642, 4294967184
    %v739 = vlaneseq
    %v740 = vshrl.u32 %v739, 7
    %v741 = vsub.s32 %v738, %v740
    %v742 = vrot.slane %v622, %v741
    %vm743 = vcmask 982912
    %v744 = vsel %vm743, %v742, %v737
    %v745 = vadd.s32 %v642, 4294967176
    %v746 = vlaneseq
    %v747 = vshrl.u32 %v746, 7
    %v748 = vsub.s32 %v745, %v747
    %v749 = vrot.slane %v624, %v748
    %vm750 = vcmask 1048512
    %v751 = vsel %vm750, %v749, %v744
    %753 = vst [vmem:[#allocation9] sm:$0x1] %v751
    // Predicated region
    $region42: #{tpu_custom_call.1} parent=1 // pred_check
      _
    $region43: #{tpu_custom_call.1} parent=1 // pred_check_branch
      %755 = sbr.rel (0) target = $region45
    $region44: #{tpu_custom_call.1} parent=1 // pred_region
      %s757 = ssub.s32 16, 16
      %758 = vsyncadd [#allocation5], %s757
      %s760 = sshll.u32 [#allocation9], 4
      %s761 = int_to_ptr.vmem [resolvable:$true] %s760
      %763 = dma.vmem_to_hbm [thread:$0]  %s761, 16, %s7, [#allocation5]
    $region45: #{tpu_custom_call.1} parent=1 // pred_fallthru
      _
    // Predicated region
    $region46: #{tpu_custom_call.1} parent=1 // pred_check
      _
    $region47: #{tpu_custom_call.1} parent=1 // pred_check_branch
      %765 = sbr.rel (0) target = $region49
    $region48: #{tpu_custom_call.1} parent=1 // pred_region
      %766 = dma.done [#allocation5], 16
    $region49: #{tpu_custom_call.1} parent=1 // pred_fallthru
      _
    %767 = vsyncpa [#allocation4], 1
    %768 = vsyncpa [#allocation7], 1
    %769 = vsyncpa [#allocation5], 1

</llo_original>
